<compile_context>
chip_gen: v5e
topology: v5e:2x2
jax: 0.10.0
libtpu: 0.0.40
codegen_flags: <defaults>
</compile_context>

<pallas_src>
import jax
import jax.numpy as jnp
from jax.experimental import pallas as pl
from jax.experimental.pallas import tpu as pltpu


def _round_up(x, m):
    return ((x + m - 1) // m) * m


def _cdiv(a, b):
    return -(-a // b)


def _mlp_kernel_T(zT_ref, w1t_ref, b1_ref, w2t_ref, b2_ref, w3t_ref, b3_ref,
                  out_ref):
    """SimpleNN forward on one row tile.

    zT_ref : (n_ctx,  TILE_N)  bf16   rows on the lane axis (lane-dense)
    w*_ref : (out_features, in_features) bf16, resident across the grid
    b*_ref : (out_features, 1) f32
    out_ref: (TILE_N, n_out)   f32    natural row-major output layout
    """
    z = zT_ref[...]                                               # bf16
    # Layer 1: bf16 x bf16 -> f32 accumulate on the MXU.
    h1 = jnp.dot(w1t_ref[...], z, preferred_element_type=jnp.float32)
    h1 = jnp.maximum(h1 + b1_ref[...], 0.0).astype(jnp.bfloat16)
    # dropout(p=0.1) -> identity in eval mode
    h2 = jnp.dot(w2t_ref[...], h1, preferred_element_type=jnp.float32)
    h2 = jnp.maximum(h2 + b2_ref[...], 0.0).astype(jnp.bfloat16)
    # dropout(p=0.1) -> identity in eval mode
    yT = jnp.dot(w3t_ref[...], h2, preferred_element_type=jnp.float32)
    yT = yT + b3_ref[...]                                         # (n_out, TILE_N)
    # In-kernel XLU transpose so the HBM output is already [rows, n_out]
    # (no separate wrapper transpose pass over HBM).
    out_ref[...] = yT.T.astype(out_ref.dtype)


def _choose_tiling(n_rows, n_ctx, hidden, n_out, *, target_tile=8192,
                   vmem_budget=24 << 20):
    """Pick (tile_n, n_pad): bounded padding waste, >=2 blocks for the two v7x
    TensorCores when there is enough work, and a VMEM footprint under budget."""

    def vmem_est(tile):
        in_buf = 2 * _round_up(max(n_ctx, 16), 16) * tile * 2      # bf16 zT, dbl-buffered
        out_buf = 2 * tile * max(128, n_out) * 4                   # lane-padded f32 out
        inter = 6 * _round_up(hidden, 8) * tile * 4                # h1/h2 working copies
        wts = 4 * (hidden * n_ctx + hidden * hidden + n_out * hidden)
        return in_buf + out_buf + inter + wts + (2 << 20)

    blocks = max(1, _cdiv(n_rows, target_tile))
    if n_rows >= 4096:
        blocks = max(blocks, 2)       # keep both v7x TensorCores busy
    tile = _round_up(max(1, _cdiv(n_rows, blocks)), 128)
    while vmem_est(tile) > vmem_budget and tile > 256:
        blocks *= 2
        tile = _round_up(max(1, _cdiv(n_rows, blocks)), 128)
    return tile, blocks * tile


def simple_nn_forward(z_rows, params, *, target_tile=8192):
    """z_rows: [N, n_context] -> [N, n_out] f32 via one tiled Pallas call."""
    w1t, b1, w2t, b2, w3t, b3 = params
    n_rows, n_ctx = z_rows.shape
    hidden = w1t.shape[0]
    n_out = w3t.shape[0]

    tile_n, n_pad = _choose_tiling(n_rows, n_ctx, hidden, n_out,
                                   target_tile=target_tile)
    grid = (n_pad // tile_n,)

    # Feature-major (lane-dense) activation stream in bf16.  This transpose is
    # the only wrapper-side pass left; the output already leaves the kernel in
    # [N, n_out] layout.
    zT = jnp.transpose(z_rows).astype(jnp.bfloat16)                # [n_ctx, N]
    if n_pad != n_rows:
        zT = jnp.pad(zT, ((0, 0), (0, n_pad - n_rows)))

    # Weights feed the MXU in bf16 (accumulation stays f32 inside the kernel).
    w1b = w1t.astype(jnp.bfloat16)
    w2b = w2t.astype(jnp.bfloat16)
    w3b = w3t.astype(jnp.bfloat16)
    b1c = b1.astype(jnp.float32)
    b2c = b2.astype(jnp.float32)
    b3c = b3.astype(jnp.float32)

    resident = lambda shape: pl.BlockSpec(shape, lambda i: (0, 0))

    flops = 2 * n_pad * (n_ctx * hidden + hidden * hidden + hidden * n_out)
    bytes_accessed = (n_ctx * n_pad * 2 + n_pad * n_out * 4
                      + 2 * (hidden * n_ctx + hidden * hidden + n_out * hidden)
                      + 4 * (2 * hidden + n_out))

    y = pl.pallas_call(
        _mlp_kernel_T,
        out_shape=jax.ShapeDtypeStruct((n_pad, n_out), jnp.float32),
        grid=grid,
        in_specs=[
            pl.BlockSpec((n_ctx, tile_n), lambda i: (0, i)),   # streamed row tiles
            resident((hidden, n_ctx)), resident((hidden, 1)),
            resident((hidden, hidden)), resident((hidden, 1)),
            resident((n_out, hidden)), resident((n_out, 1)),
        ],
        out_specs=pl.BlockSpec((tile_n, n_out), lambda i: (i, 0)),
        compiler_params=pltpu.CompilerParams(
            dimension_semantics=("parallel",),       # shard row tiles across TCs (v7x)
            vmem_limit_bytes=32 * 1024 * 1024,
        ),
        cost_estimate=pl.CostEstimate(
            flops=flops, transcendentals=0, bytes_accessed=bytes_accessed),
    )(zT, w1b, b1c, w2b, b2c, w3b, b3c)

    return y[:n_rows]                                              # [N, n_out] f32


def dff_prediction_forward(Z, params):
    """
    DFF forward, prediction part only.

    Z: [batch, time, n_context] (time == hyperparameters['f'])
    Returns {'theta': [batch, time, f, 1]} -- the stack over t of
    prediction_module(Z[:, t, ...])['theta'].
    """
    B, T, C = Z.shape
    z_rows = Z.reshape(B * T, C).astype(jnp.float32)
    y = simple_nn_forward(z_rows, params)                          # [B*T, f]
    f = y.shape[-1]
    theta = y.reshape(B, T, f, 1)                                  # unsqueeze(-1) per timestep
    # TODO(synk): the CvxpyLayer optimisation_module (differentiable convex
    # optimisation solve) has no Pallas/TPU-kernel equivalent; only Theta here.
    return {"theta": theta}


def init_params(key, n_context, hidden_size, n_out):
    """Deterministic init. Weights stored transposed (out, in); biases (out, 1)."""
    k1, k2, k3, k4, k5, k6 = jax.random.split(key, 6)
    s1 = 1.0 / jnp.sqrt(n_context)
    s2 = 1.0 / jnp.sqrt(hidden_size)
    w1t = jax.random.uniform(k1, (hidden_size, n_context), jnp.float32, -s1, s1)
    b1 = jax.random.uniform(k4, (hidden_size, 1), jnp.float32, -s1, s1)
    w2t = jax.random.uniform(k2, (hidden_size, hidden_size), jnp.float32, -s2, s2)
    b2 = jax.random.uniform(k5, (hidden_size, 1), jnp.float32, -s2, s2)
    w3t = jax.random.uniform(k3, (n_out, hidden_size), jnp.float32, -s2, s2)
    b3 = jax.random.uniform(k6, (n_out, 1), jnp.float32, -s2, s2)
    return (w1t, b1, w2t, b2, w3t, b3)


if __name__ == "__main__":
    # hyperparameters: n_context=4, latent_size=32, f=8
    batch, f, n_context, latent_size = 2, 8, 4, 32

    key = jax.random.PRNGKey(0)
    k_z, k_p = jax.random.split(key)
    Z = jax.random.normal(k_z, (batch, f, n_context), jnp.float32)
    params = init_params(k_p, n_context, latent_size, f)

    out = dff_prediction_forward(Z, params)
    theta = jax.block_until_ready(out["theta"])
    assert theta.shape == (batch, f, f, 1)

    w1t, b1, w2t, b2, w3t, b3 = params
    hp = jax.lax.Precision.HIGHEST
    bf = lambda a: a.astype(jnp.bfloat16).astype(jnp.float32)

    # (1) Reference mirroring the kernel's numerics (bf16 operands, f32
    #     accumulation, bf16 hand-off between layers) -> tight tolerance.
    zr = bf(Z.reshape(batch * f, n_context))
    h1 = jnp.maximum(jnp.dot(zr, bf(w1t).T, precision=hp) + b1.T, 0.0)
    h2 = jnp.maximum(jnp.dot(bf(h1), bf(w2t).T, precision=hp) + b2.T, 0.0)
    ref_matched = (jnp.dot(bf(h2), bf(w3t).T, precision=hp)
                   + b3.T).reshape(batch, f, f, 1)
    assert jnp.allclose(theta, ref_matched, atol=5e-3, rtol=5e-3), \
        "mismatch vs matched-precision reference"

    # (2) Pure-f32 reference (original PyTorch semantics) -> bounds bf16 drift.
    zr32 = Z.reshape(batch * f, n_context)
    h1f = jnp.maximum(jnp.dot(zr32, w1t.T, precision=hp) + b1.T, 0.0)
    h2f = jnp.maximum(jnp.dot(h1f, w2t.T, precision=hp) + b2.T, 0.0)
    ref_f32 = (jnp.dot(h2f, w3t.T, precision=hp) + b3.T).reshape(batch, f, f, 1)
    assert jnp.allclose(theta, ref_f32, atol=3e-2, rtol=3e-2), \
        "bf16 drift vs f32 reference too large"

    print("KERNEL_OK")
</pallas_src>

<mosaic_0001>
module attributes {stable_mosaic.version = 11 : i64} {
  func.func @_mlp_kernel_T(%arg0: i32, %arg1: memref<4x128xbf16, #tpu.memory_space<vmem>>, %arg2: memref<32x4xbf16, #tpu.memory_space<vmem>>, %arg3: memref<32x1xf32, #tpu.memory_space<vmem>>, %arg4: memref<32x32xbf16, #tpu.memory_space<vmem>>, %arg5: memref<32x1xf32, #tpu.memory_space<vmem>>, %arg6: memref<8x32xbf16, #tpu.memory_space<vmem>>, %arg7: memref<8x1xf32, #tpu.memory_space<vmem>>, %arg8: memref<128x8xf32, #tpu.memory_space<vmem>>) attributes {dimension_semantics = [#tpu.dimension_semantics<parallel>], iteration_bounds = array<i64: 1>, scalar_prefetch = 0 : i64, scratch_operands = 0 : i64, tpu.core_type = #tpu.core_type<tc>, window_params = [{transform_indices = @transform_0, window_bounds = array<i64: 4, 128>}, {pipeline_mode = #tpu.pipeline_mode<synchronous>, transform_indices = @transform_1, window_bounds = array<i64: 32, 4>}, {pipeline_mode = #tpu.pipeline_mode<synchronous>, transform_indices = @transform_2, window_bounds = array<i64: 32, 1>}, {pipeline_mode = #tpu.pipeline_mode<synchronous>, transform_indices = @transform_3, window_bounds = array<i64: 32, 32>}, {pipeline_mode = #tpu.pipeline_mode<synchronous>, transform_indices = @transform_4, window_bounds = array<i64: 32, 1>}, {pipeline_mode = #tpu.pipeline_mode<synchronous>, transform_indices = @transform_5, window_bounds = array<i64: 8, 32>}, {pipeline_mode = #tpu.pipeline_mode<synchronous>, transform_indices = @transform_6, window_bounds = array<i64: 8, 1>}, {transform_indices = @transform_7, window_bounds = array<i64: 128, 8>}]} {
    %c0 = arith.constant 0 : index
    %c0_0 = arith.constant 0 : index
    %0 = vector.load %arg1[%c0, %c0_0] : memref<4x128xbf16, #tpu.memory_space<vmem>>, vector<4x128xbf16>
    %c0_1 = arith.constant 0 : index
    %c0_2 = arith.constant 0 : index
    %1 = vector.load %arg2[%c0_1, %c0_2] : memref<32x4xbf16, #tpu.memory_space<vmem>>, vector<32x4xbf16>
    %cst = arith.constant dense<0.000000e+00> : vector<32x128xf32>
    %2 = tpu.matmul %1, %0, %cst {dimension_numbers = #tpu.dot_dimension_numbers<[1], [0], [0], [1], [0, 0, 1, 1], [], []>} : vector<32x4xbf16>, vector<4x128xbf16>, vector<32x128xf32> -> vector<32x128xf32>
    %c0_3 = arith.constant 0 : index
    %c0_4 = arith.constant 0 : index
    %3 = vector.load %arg3[%c0_3, %c0_4] : memref<32x1xf32, #tpu.memory_space<vmem>>, vector<32x1xf32>
    %4 = vector.broadcast %3 : vector<32x1xf32> to vector<32x128xf32>
    %5 = arith.addf %2, %4 : vector<32x128xf32>
    %cst_5 = arith.constant 0.000000e+00 : f32
    %6 = vector.broadcast %cst_5 : f32 to vector<32x128xf32>
    %7 = arith.maximumf %5, %6 : vector<32x128xf32>
    %8 = arith.truncf %7 : vector<32x128xf32> to vector<32x128xbf16>
    %c0_6 = arith.constant 0 : index
    %c0_7 = arith.constant 0 : index
    %9 = vector.load %arg4[%c0_6, %c0_7] : memref<32x32xbf16, #tpu.memory_space<vmem>>, vector<32x32xbf16>
    %cst_8 = arith.constant dense<0.000000e+00> : vector<32x128xf32>
    %10 = tpu.matmul %9, %8, %cst_8 {dimension_numbers = #tpu.dot_dimension_numbers<[1], [0], [0], [1], [0, 0, 1, 1], [], []>} : vector<32x32xbf16>, vector<32x128xbf16>, vector<32x128xf32> -> vector<32x128xf32>
    %c0_9 = arith.constant 0 : index
    %c0_10 = arith.constant 0 : index
    %11 = vector.load %arg5[%c0_9, %c0_10] : memref<32x1xf32, #tpu.memory_space<vmem>>, vector<32x1xf32>
    %12 = vector.broadcast %11 : vector<32x1xf32> to vector<32x128xf32>
    %13 = arith.addf %10, %12 : vector<32x128xf32>
    %cst_11 = arith.constant 0.000000e+00 : f32
    %14 = vector.broadcast %cst_11 : f32 to vector<32x128xf32>
    %15 = arith.maximumf %13, %14 : vector<32x128xf32>
    %16 = arith.truncf %15 : vector<32x128xf32> to vector<32x128xbf16>
    %c0_12 = arith.constant 0 : index
    %c0_13 = arith.constant 0 : index
    %17 = vector.load %arg6[%c0_12, %c0_13] : memref<8x32xbf16, #tpu.memory_space<vmem>>, vector<8x32xbf16>
    %cst_14 = arith.constant dense<0.000000e+00> : vector<8x128xf32>
    %18 = tpu.matmul %17, %16, %cst_14 {dimension_numbers = #tpu.dot_dimension_numbers<[1], [0], [0], [1], [0, 0, 1, 1], [], []>} : vector<8x32xbf16>, vector<32x128xbf16>, vector<8x128xf32> -> vector<8x128xf32>
    %c0_15 = arith.constant 0 : index
    %c0_16 = arith.constant 0 : index
    %19 = vector.load %arg7[%c0_15, %c0_16] : memref<8x1xf32, #tpu.memory_space<vmem>>, vector<8x1xf32>
    %20 = vector.broadcast %19 : vector<8x1xf32> to vector<8x128xf32>
    %21 = arith.addf %18, %20 : vector<8x128xf32>
    %22 = tpu.transpose %21, [1, 0] : vector<8x128xf32> -> vector<128x8xf32>
    %c0_17 = arith.constant 0 : index
    %c0_18 = arith.constant 0 : index
    %23 = vector.load %arg8[%c0_17, %c0_18] : memref<128x8xf32, #tpu.memory_space<vmem>>, vector<128x8xf32>
    tpu.vector_store %arg8[%c0_17, %c0_18], %22 {strides = array<i32>} : memref<128x8xf32, #tpu.memory_space<vmem>>, vector<128x8xf32>,
    return
  }
  func.func @transform_0(%arg0: i32) -> (i32, i32) {
    %c0_i32 = arith.constant 0 : i32
    %c0_i32_0 = arith.constant 0 : i32
    return %c0_i32, %arg0 : i32, i32
  }
  func.func @transform_1(%arg0: i32) -> (i32, i32) {
    %c0_i32 = arith.constant 0 : i32
    %c0_i32_0 = arith.constant 0 : i32
    %c0_i32_1 = arith.constant 0 : i32
    return %c0_i32, %c0_i32_0 : i32, i32
  }
  func.func @transform_2(%arg0: i32) -> (i32, i32) {
    %c0_i32 = arith.constant 0 : i32
    %c0_i32_0 = arith.constant 0 : i32
    %c0_i32_1 = arith.constant 0 : i32
    return %c0_i32, %c0_i32_0 : i32, i32
  }
  func.func @transform_3(%arg0: i32) -> (i32, i32) {
    %c0_i32 = arith.constant 0 : i32
    %c0_i32_0 = arith.constant 0 : i32
    %c0_i32_1 = arith.constant 0 : i32
    return %c0_i32, %c0_i32_0 : i32, i32
  }
  func.func @transform_4(%arg0: i32) -> (i32, i32) {
    %c0_i32 = arith.constant 0 : i32
    %c0_i32_0 = arith.constant 0 : i32
    %c0_i32_1 = arith.constant 0 : i32
    return %c0_i32, %c0_i32_0 : i32, i32
  }
  func.func @transform_5(%arg0: i32) -> (i32, i32) {
    %c0_i32 = arith.constant 0 : i32
    %c0_i32_0 = arith.constant 0 : i32
    %c0_i32_1 = arith.constant 0 : i32
    return %c0_i32, %c0_i32_0 : i32, i32
  }
  func.func @transform_6(%arg0: i32) -> (i32, i32) {
    %c0_i32 = arith.constant 0 : i32
    %c0_i32_0 = arith.constant 0 : i32
    %c0_i32_1 = arith.constant 0 : i32
    return %c0_i32, %c0_i32_0 : i32, i32
  }
  func.func @transform_7(%arg0: i32) -> (i32, i32) {
    %c0_i32 = arith.constant 0 : i32
    %c0_i32_0 = arith.constant 0 : i32
    return %arg0, %c0_i32 : i32, i32
  }
}

</mosaic_0001>

<llo_original>
// kernel: tpu_custom_call.1
$region0: #{tpu_custom_call.1}
  #allocation0 [shape = 'u32[]', space=smem, size = 0x4, offset = 0x4, fixed_abs, tag = 'smem constant byte address 0x4 - core index']
  #allocation1 [shape = 'u32[72,128]{1,0:T(1,128)}', space=vmem, size = 0x9000, scoped, tag = 'internal scratch']
  %s0 = inlined_call_operand.vmem [shape: bf16[4,128], index: 0, kind: input, shape index: {}]
  %s1 = inlined_call_operand.vmem [shape: bf16[32,4], index: 1, kind: input, shape index: {}]
  %s2 = inlined_call_operand.vmem [shape: f32[32,1], index: 2, kind: input, shape index: {}]
  %s3 = inlined_call_operand.vmem [shape: bf16[32,32], index: 3, kind: input, shape index: {}]
  %s4 = inlined_call_operand.vmem [shape: f32[32,1], index: 4, kind: input, shape index: {}]
  %s5 = inlined_call_operand.vmem [shape: bf16[8,32], index: 5, kind: input, shape index: {}]
  %s6 = inlined_call_operand.vmem [shape: f32[8,1], index: 6, kind: input, shape index: {}]
  %s7 = inlined_call_operand.vmem [shape: f32[128,8], index: 7, kind: output, shape index: {}]
  %s8 = sld [smem:[#allocation0]]
  $region38: #{tpu_custom_call.1} parent=0
    _
  %s10 = ssub.s32 1, %s8
  %s11 = scalar_select 0, %s10, %s8
  // Predicated region
  $region2: #{tpu_custom_call.1} parent=0 // pred_check
    _
  $region3: #{tpu_custom_call.1} parent=0 // pred_check_branch
    %13 = sbr.rel (0) target = $region5
  $region4: #{tpu_custom_call.1} parent=0 // pred_region
    _
  $region5: #{tpu_custom_call.1} parent=0 // pred_fallthru
    _
  // Predicated region
  $region6: #{tpu_custom_call.1} parent=0 // pred_check
    _
  $region7: #{tpu_custom_call.1} parent=0 // pred_check_branch
    %15 = sbr.rel (0) target = $region9
  $region8: #{tpu_custom_call.1} parent=0 // pred_region
    _
  $region9: #{tpu_custom_call.1} parent=0 // pred_fallthru
    _
  // Predicated region
  $region10: #{tpu_custom_call.1} parent=0 // pred_check
    _
  $region11: #{tpu_custom_call.1} parent=0 // pred_check_branch
    %17 = sbr.rel (0) target = $region13
  $region12: #{tpu_custom_call.1} parent=0 // pred_region
    _
  $region13: #{tpu_custom_call.1} parent=0 // pred_fallthru
    _
  // Predicated region
  $region14: #{tpu_custom_call.1} parent=0 // pred_check
    _
  $region15: #{tpu_custom_call.1} parent=0 // pred_check_branch
    %19 = sbr.rel (0) target = $region17
  $region16: #{tpu_custom_call.1} parent=0 // pred_region
    _
  $region17: #{tpu_custom_call.1} parent=0 // pred_fallthru
    _
  // Predicated region
  $region18: #{tpu_custom_call.1} parent=0 // pred_check
    _
  $region19: #{tpu_custom_call.1} parent=0 // pred_check_branch
    %21 = sbr.rel (0) target = $region21
  $region20: #{tpu_custom_call.1} parent=0 // pred_region
    _
  $region21: #{tpu_custom_call.1} parent=0 // pred_fallthru
    _
  // Predicated region
  $region22: #{tpu_custom_call.1} parent=0 // pred_check
    _
  $region23: #{tpu_custom_call.1} parent=0 // pred_check_branch
    %23 = sbr.rel (0) target = $region25
  $region24: #{tpu_custom_call.1} parent=0 // pred_region
    _
  $region25: #{tpu_custom_call.1} parent=0 // pred_fallthru
    _
  // Predicated region
  $region26: #{tpu_custom_call.1} parent=0 // pred_check
    _
  $region27: #{tpu_custom_call.1} parent=0 // pred_check_branch
    %25 = sbr.rel (0) target = $region29
  $region28: #{tpu_custom_call.1} parent=0 // pred_region
    _
  $region29: #{tpu_custom_call.1} parent=0 // pred_fallthru
    _
  %v27 = vld [vmem:[%s0] sm:$0x3]
  %v28 = vld [vmem:[%s1] sm:$0xf]
  %v29 = vld [vmem:[%s1 + $0x4] sm:$0xf]
  %v30 = vld [vmem:[%s1 + $0x8] sm:$0xf]
  %v31 = vld [vmem:[%s1 + $0xc] sm:$0xf]
  %v32 = vld [vmem:[%s2] sm:$0xff]
  %v33 = vld [vmem:[%s2 + $0x8] sm:$0xff]
  %v34 = vld [vmem:[%s2 + $0x10] sm:$0xff]
  %v35 = vld [vmem:[%s2 + $0x18] sm:$0xff]
  %37 = vset.pattern.permute.xlu0 0
  %38 = vperm.xlu0 %37, %v32
  %v39 = vpop.permute.xlu0 %38
  %42 = vset.pattern.permute.xlu0 0
  %43 = vperm.xlu0 %42, %v33
  %v44 = vpop.permute.xlu0 %43
  %47 = vset.pattern.permute.xlu0 0
  %48 = vperm.xlu0 %47, %v34
  %v49 = vpop.permute.xlu0 %48
  %52 = vset.pattern.permute.xlu0 0
  %53 = vperm.xlu0 %52, %v35
  %v54 = vpop.permute.xlu0 %53
  %v60 = vunpack.c.l.b16 %v28
  %v61 = vunpack.c.l.b16 %v29
  %v62 = vunpack.c.l.b16 %v30
  %v63 = vunpack.c.l.b16 %v31
  %v64 = vpack.c.b16 %v61, %v60
  %v65 = vpack.c.b16 %v63, %v62
  %vm66 = vcmask 31744
  %v68 = vsel %vm66, %v64, 0
  %v71 = vsel %vm66, %v65, 0
  %vm73 = vcmask 1041408
  %v75 = vsel %vm73, %v27, 0
  %77 = vmatpush.bf16.msra.mxu0 0
  %78 = vmatpush.bf16.msra.mxu0 0
  %79 = vmatpush.bf16.msra.mxu0 0
  %80 = vmatpush.bf16.msra.mxu0 0
  %81 = vmatpush.bf16.msra.mxu0 0
  %82 = vmatpush.bf16.msra.mxu0 0
  %83 = vmatpush.bf16.msra.mxu0 0
  %84 = vmatpush.bf16.msra.mxu0 %v75
  %85 = vmatmul.bf16.gmra.mxu0 %v68
  %v86 = vpop.f32.mrf.mxu0
  %v87 = vadd.f32 %v39, %v86
  %v88 = vpop.f32.mrf.mxu0
  %v89 = vadd.f32 %v44, %v88
  %90 = vmatmul.bf16.gmra.mxu0 %v71
  %v91 = vpop.f32.mrf.mxu0
  %v92 = vadd.f32 %v49, %v91
  %v93 = vpop.f32.mrf.mxu0
  %v94 = vadd.f32 %v54, %v93
  %95 = vdwg.mxu0
  %v96 = vmax.f32 %v87, 0.0
  %v97 = vmax.f32 %v89, 0.0
  %v98 = vmax.f32 %v92, 0.0
  %v99 = vmax.f32 %v94, 0.0
  %v100 = vpack.c.bf16 %v97, %v96
  %v101 = vpack.c.bf16 %v99, %v98
  %v102 = vld [vmem:[%s3] sm:$0xf]
  %v103 = vld [vmem:[%s3 + $0x4] sm:$0xf]
  %v104 = vld [vmem:[%s3 + $0x8] sm:$0xf]
  %v105 = vld [vmem:[%s3 + $0xc] sm:$0xf]
  %v106 = vld [vmem:[%s4] sm:$0xff]
  %v107 = vld [vmem:[%s4 + $0x8] sm:$0xff]
  %v108 = vld [vmem:[%s4 + $0x10] sm:$0xff]
  %v109 = vld [vmem:[%s4 + $0x18] sm:$0xff]
  %111 = vset.pattern.permute.xlu0 0
  %112 = vperm.xlu0 %111, %v106
  %v113 = vpop.permute.xlu0 %112
  %116 = vset.pattern.permute.xlu0 0
  %117 = vperm.xlu0 %116, %v107
  %v118 = vpop.permute.xlu0 %117
  %121 = vset.pattern.permute.xlu0 0
  %122 = vperm.xlu0 %121, %v108
  %v123 = vpop.permute.xlu0 %122
  %126 = vset.pattern.permute.xlu0 0
  %127 = vperm.xlu0 %126, %v109
  %v128 = vpop.permute.xlu0 %127
  %v134 = vunpack.c.l.b16 %v102
  %v135 = vunpack.c.l.b16 %v103
  %v136 = vunpack.c.l.b16 %v104
  %v137 = vunpack.c.l.b16 %v105
  %v138 = vpack.c.b16 %v135, %v134
  %v139 = vpack.c.b16 %v137, %v136
  %vm140 = vcmask 261120
  %v142 = vsel %vm140, %v138, 0
  %v145 = vsel %vm140, %v139, 0
  %147 = vmatpush.bf16.msra.mxu0 0
  %148 = vmatpush.bf16.msra.mxu0 0
  %149 = vmatpush.bf16.msra.mxu0 0
  %150 = vmatpush.bf16.msra.mxu0 0
  %151 = vmatpush.bf16.msra.mxu0 0
  %152 = vmatpush.bf16.msra.mxu0 0
  %153 = vmatpush.bf16.msra.mxu0 %v101
  %154 = vmatpush.bf16.msra.mxu0 %v100
  %155 = vmatmul.bf16.gmra.mxu0 %v142
  %v156 = vpop.f32.mrf.mxu0
  %v157 = vadd.f32 %v113, %v156
  %v158 = vpop.f32.mrf.mxu0
  %v159 = vadd.f32 %v118, %v158
  %160 = vmatmul.bf16.gmra.mxu0 %v145
  %v161 = vpop.f32.mrf.mxu0
  %v162 = vadd.f32 %v123, %v161
  %v163 = vpop.f32.mrf.mxu0
  %v164 = vadd.f32 %v128, %v163
  %165 = vdwg.mxu0
  %v166 = vmax.f32 %v157, 0.0
  %v167 = vmax.f32 %v159, 0.0
  %v168 = vmax.f32 %v162, 0.0
  %v169 = vmax.f32 %v164, 0.0
  %v170 = vpack.c.bf16 %v167, %v166
  %v171 = vpack.c.bf16 %v169, %v168
  %v172 = vld [vmem:[%s5] sm:$0xf]
  %v173 = vld [vmem:[%s6] sm:$0xff]
  %175 = vset.pattern.permute.xlu0 0
  %176 = vperm.xlu0 %175, %v173
  %v177 = vpop.permute.xlu0 %176
  %v180 = vsel %vm140, %v172, 0
  %182 = vmatpush.bf16.msra.mxu0 0
  %183 = vmatpush.bf16.msra.mxu0 0
  %184 = vmatpush.bf16.msra.mxu0 0
  %185 = vmatpush.bf16.msra.mxu0 0
  %186 = vmatpush.bf16.msra.mxu0 0
  %187 = vmatpush.bf16.msra.mxu0 0
  %188 = vmatpush.bf16.msra.mxu0 %v171
  %189 = vmatpush.bf16.msra.mxu0 %v170
  %190 = vmatmul.bf16.gmra.mxu0 %v180
  %v191 = vpop.f32.mrf.mxu0
  %v192 = vadd.f32 %v177, %v191
  %v193 = vpop.f32.mrf.mxu0
  %194 = vdwg.mxu0
  %195 = vxpose.xlu0.b32.start [1/16] %v192, 128
  %196 = vxpose.xlu0.b32.cont [2/16] 0.0, 128
  %197 = vxpose.xlu0.b32.cont [3/16] 0.0, 128
  %198 = vxpose.xlu0.b32.cont [4/16] 0.0, 128
  %199 = vxpose.xlu0.b32.cont [5/16] 0.0, 128
  %200 = vxpose.xlu0.b32.cont [6/16] 0.0, 128
  %201 = vxpose.xlu0.b32.cont [7/16] 0.0, 128
  %202 = vxpose.xlu0.b32.cont [8/16] 0.0, 128
  %203 = vxpose.xlu0.b32.cont [9/16] 0.0, 128
  %204 = vxpose.xlu0.b32.cont [10/16] 0.0, 128
  %205 = vxpose.xlu0.b32.cont [11/16] 0.0, 128
  %206 = vxpose.xlu0.b32.cont [12/16] 0.0, 128
  %207 = vxpose.xlu0.b32.cont [13/16] 0.0, 128
  %208 = vxpose.xlu0.b32.cont [14/16] 0.0, 128
  %209 = vxpose.xlu0.b32.cont [15/16] 0.0, 128
  %210 = vxpose.xlu0.b32.end [16/16] 0.0, 128
  %v211 = vpop.trf.xlu0
  %v212 = vpop.trf.xlu0
  %v213 = vpop.trf.xlu0
  %v214 = vpop.trf.xlu0
  %v215 = vpop.trf.xlu0
  %v216 = vpop.trf.xlu0
  %v217 = vpop.trf.xlu0
  %v218 = vpop.trf.xlu0
  %v219 = vpop.trf.xlu0
  %v220 = vpop.trf.xlu0
  %v221 = vpop.trf.xlu0
  %v222 = vpop.trf.xlu0
  %v223 = vpop.trf.xlu0
  %v224 = vpop.trf.xlu0
  %v225 = vpop.trf.xlu0
  %v226 = vpop.trf.xlu0
  %vm227 = vcmask 64512
  %228 = vst.msk [vmem:[%s7] sm:$0xff] %vm227, %v211
  %229 = vst.msk [vmem:[%s7 + $0x8] sm:$0xff] %vm227, %v212
  %230 = vst.msk [vmem:[%s7 + $0x10] sm:$0xff] %vm227, %v213
  %231 = vst.msk [vmem:[%s7 + $0x18] sm:$0xff] %vm227, %v214
  %232 = vst.msk [vmem:[%s7 + $0x20] sm:$0xff] %vm227, %v215
  %233 = vst.msk [vmem:[%s7 + $0x28] sm:$0xff] %vm227, %v216
  %234 = vst.msk [vmem:[%s7 + $0x30] sm:$0xff] %vm227, %v217
  %235 = vst.msk [vmem:[%s7 + $0x38] sm:$0xff] %vm227, %v218
  %236 = vst.msk [vmem:[%s7 + $0x40] sm:$0xff] %vm227, %v219
  %237 = vst.msk [vmem:[%s7 + $0x48] sm:$0xff] %vm227, %v220
  %238 = vst.msk [vmem:[%s7 + $0x50] sm:$0xff] %vm227, %v221
  %239 = vst.msk [vmem:[%s7 + $0x58] sm:$0xff] %vm227, %v222
  %240 = vst.msk [vmem:[%s7 + $0x60] sm:$0xff] %vm227, %v223
  %241 = vst.msk [vmem:[%s7 + $0x68] sm:$0xff] %vm227, %v224
  %242 = vst.msk [vmem:[%s7 + $0x70] sm:$0xff] %vm227, %v225
  %243 = vst.msk [vmem:[%s7 + $0x78] sm:$0xff] %vm227, %v226
  // Predicated region
  $region30: #{tpu_custom_call.1} parent=0 // pred_check
    _
  $region31: #{tpu_custom_call.1} parent=0 // pred_check_branch
    %245 = sbr.rel (0) target = $region33
  $region32: #{tpu_custom_call.1} parent=0 // pred_region
    _
  $region33: #{tpu_custom_call.1} parent=0 // pred_fallthru
    _
  // Predicated region
  $region34: #{tpu_custom_call.1} parent=0 // pred_check
    _
  $region35: #{tpu_custom_call.1} parent=0 // pred_check_branch
    %247 = sbr.rel (0) target = $region37
  $region36: #{tpu_custom_call.1} parent=0 // pred_region
    _
  $region37: #{tpu_custom_call.1} parent=0 // pred_fallthru
    _

</llo_original>
